<compile_context>
chip_gen: v6e
topology: v6e:2x2x1
jax: 0.10.0
libtpu: 0.0.40
codegen_flags: <defaults>
</compile_context>

<pallas_src>
import functools

import jax
import jax.numpy as jnp
from jax.experimental import pallas as pl
from jax.experimental.pallas import tpu as pltpu


def _round_up(v, m):
    return (v + m - 1) // m * m


def _ffn_kernel(x_ref, wu_ref, wd_ref, o_ref, acc_ref):
    # x_ref  : [TM, E]   input rows (same block across the H axis)
    # wu_ref : [E,  TH]  bf16 slab of up_proj.weight.T
    # wd_ref : [TH, E]   bf16 slab of down_proj.weight.T
    # o_ref  : [TM, E]   output tile (resident across the H axis)
    # acc_ref: [TM, E]   f32 accumulator scratch
    h_idx = pl.program_id(1)

    @pl.when(h_idx == 0)
    def _init():
        acc_ref[...] = jnp.zeros_like(acc_ref)

    x_bf = x_ref[...].astype(jnp.bfloat16)
    h = jnp.dot(x_bf, wu_ref[...], preferred_element_type=jnp.float32)
    h = jnp.maximum(h, 0.0)                                   # ReLU
    acc_ref[...] += jnp.dot(h.astype(jnp.bfloat16), wd_ref[...],
                            preferred_element_type=jnp.float32)

    @pl.when(h_idx == pl.num_programs(1) - 1)
    def _finalize():
        o_ref[...] = (x_ref[...].astype(jnp.float32)
                      + acc_ref[...]).astype(o_ref.dtype)


@functools.partial(jax.jit, static_argnames=("tile_m", "tile_h"))
def qblock_ffn(x_in, w_up, w_down, *, tile_m=256, tile_h=512):
    """QBlockFFN forward: x + down_proj(relu(up_proj(x))), no biases.

    x_in   : [..., embed_dim]
    w_up   : [hidden_dim, embed_dim]   (PyTorch up_proj.weight layout)
    w_down : [embed_dim, hidden_dim]   (PyTorch down_proj.weight layout)
    Returns the same shape/dtype as x_in.
    """
    orig_shape = x_in.shape
    embed_dim = orig_shape[-1]
    hidden_dim = w_up.shape[0]

    x2d = x_in.reshape(-1, embed_dim)
    m = x2d.shape[0]

    # Lane-dense / MXU-friendly padded sizes and effective tiles.
    e_pad = _round_up(embed_dim, 128)
    tm = min(tile_m, _round_up(m, 8))
    m_pad = _round_up(m, tm)
    th = min(tile_h, _round_up(hidden_dim, 128))
    h_pad = _round_up(hidden_dim, th)

    # Zero padding is neutral through matmul + relu + residual; sliced off below.
    x_p = jnp.pad(x2d, ((0, m_pad - m), (0, e_pad - embed_dim)))
    wu_t = jnp.pad(w_up.T, ((0, e_pad - embed_dim), (0, h_pad - hidden_dim)))
    wd_t = jnp.pad(w_down.T, ((0, h_pad - hidden_dim), (0, e_pad - embed_dim)))
    wu_t = wu_t.astype(jnp.bfloat16)   # bf16 MXU operands, halved weight DMA
    wd_t = wd_t.astype(jnp.bfloat16)

    # Explicit VMEM budget: double-buffered blocks + f32 accumulator + headroom,
    # capped at 64 MiB so it also fits a v7x TensorCore.
    itemsize = jnp.dtype(x_in.dtype).itemsize
    x_blk = tm * e_pad * itemsize
    o_blk = tm * e_pad * itemsize
    wu_blk = e_pad * th * 2
    wd_blk = th * e_pad * 2
    acc_blk = tm * e_pad * 4
    vmem_needed = 2 * (x_blk + o_blk + wu_blk + wd_blk) + acc_blk
    vmem_limit = min(max(int(vmem_needed * 1.5) + (4 << 20), 32 << 20), 64 << 20)

    grid = (m_pad // tm, h_pad // th)

    out = pl.pallas_call(
        _ffn_kernel,
        out_shape=jax.ShapeDtypeStruct((m_pad, e_pad), x_in.dtype),
        grid=grid,
        in_specs=[
            pl.BlockSpec((tm, e_pad), lambda i, h: (i, 0)),   # x rows
            pl.BlockSpec((e_pad, th), lambda i, h: (0, h)),   # Wu^T H-slab
            pl.BlockSpec((th, e_pad), lambda i, h: (h, 0)),   # Wd^T H-slab
        ],
        out_specs=pl.BlockSpec((tm, e_pad), lambda i, h: (i, 0)),
        scratch_shapes=[pltpu.VMEM((tm, e_pad), jnp.float32)],
        compiler_params=pltpu.CompilerParams(
            dimension_semantics=("parallel", "arbitrary"),
            vmem_limit_bytes=vmem_limit,
        ),
    )(x_p, wu_t, wd_t)

    return out[:m, :embed_dim].reshape(orig_shape)


def init_params(key, embed_dim, hidden_dim, dtype=jnp.float32):
    """Deterministic weight init mirroring nn.Linear shapes.

    Uses the qinco1_mode=True-style (non-zero) init so the kernel output is
    non-trivial; qinco1_mode=False would zero down_proj -> identity forward.
    """
    k1, k2 = jax.random.split(key)
    bound_up = (2.0 ** 0.5) * (3.0 / embed_dim) ** 0.5        # kaiming-uniform
    w_up = jax.random.uniform(k1, (hidden_dim, embed_dim), dtype,
                              minval=-bound_up, maxval=bound_up)
    bound_dn = 1.0 / (hidden_dim ** 0.5)
    w_down = jax.random.uniform(k2, (embed_dim, hidden_dim), dtype,
                                minval=-bound_dn, maxval=bound_dn)
    return w_up, w_down


def reference(x_in, w_up, w_down):
    h = jnp.maximum(x_in @ w_up.T, 0.0)
    return x_in + h @ w_down.T


if __name__ == "__main__":
    # small shapes consistent with the module: (batch, seq, embed_dim)
    batch, seq, embed_dim, hidden_dim = 2, 8, 32, 64
    key = jax.random.PRNGKey(0)
    kx, kw = jax.random.split(key)

    x = jax.random.normal(kx, (batch, seq, embed_dim), jnp.float32)
    w_up, w_down = init_params(kw, embed_dim, hidden_dim)

    out = qblock_ffn(x, w_up, w_down)
    out = jax.block_until_ready(out)

    ref = reference(x, w_up, w_down)
    assert out.shape == x.shape and out.dtype == x.dtype
    # bf16 MXU operands -> relaxed tolerance vs the f32 reference.
    max_err = jnp.max(jnp.abs(out - ref))
    assert jnp.allclose(out, ref, atol=3e-2, rtol=3e-2), (
        f"mismatch vs reference, max abs err {max_err:.4e}")
    print("KERNEL_OK")
</pallas_src>

<mosaic_0001>
module attributes {stable_mosaic.version = 11 : i64} {
  func.func @_ffn_kernel(%arg0: i32, %arg1: i32, %arg2: memref<16x128xf32, #tpu.memory_space<vmem>>, %arg3: memref<128x128xbf16, #tpu.memory_space<vmem>>, %arg4: memref<128x128xbf16, #tpu.memory_space<vmem>>, %arg5: memref<16x128xf32, #tpu.memory_space<vmem>>, %arg6: memref<16x128xf32, #tpu.memory_space<vmem>>) attributes {dimension_semantics = [#tpu.dimension_semantics<parallel>, #tpu.dimension_semantics<arbitrary>], iteration_bounds = array<i64: 1, 1>, scalar_prefetch = 0 : i64, scratch_operands = 1 : i64, tpu.core_type = #tpu.core_type<tc>, window_params = [{transform_indices = @transform_0, window_bounds = array<i64: 16, 128>}, {transform_indices = @transform_1, window_bounds = array<i64: 128, 128>}, {transform_indices = @transform_2, window_bounds = array<i64: 128, 128>}, {transform_indices = @transform_3, window_bounds = array<i64: 16, 128>}]} {
    %c0_i32 = arith.constant 0 : i32
    %0 = arith.cmpi eq, %arg1, %c0_i32 : i32
    %1 = arith.extui %0 : i1 to i32
    %c0_i32_0 = arith.constant 0 : i32
    %2 = arith.cmpi ne, %1, %c0_i32_0 : i32
    scf.if %2 {
      %cst_14 = arith.constant 0.000000e+00 : f32
      %18 = vector.broadcast %cst_14 : f32 to vector<16x128xf32>
      %c0_15 = arith.constant 0 : index
      %c0_16 = arith.constant 0 : index
      %19 = vector.load %arg6[%c0_15, %c0_16] : memref<16x128xf32, #tpu.memory_space<vmem>>, vector<16x128xf32>
      tpu.vector_store %arg6[%c0_15, %c0_16], %18 {strides = array<i32>} : memref<16x128xf32, #tpu.memory_space<vmem>>, vector<16x128xf32>,
    } else {
    }
    %c0 = arith.constant 0 : index
    %c0_1 = arith.constant 0 : index
    %3 = vector.load %arg2[%c0, %c0_1] : memref<16x128xf32, #tpu.memory_space<vmem>>, vector<16x128xf32>
    %4 = arith.truncf %3 : vector<16x128xf32> to vector<16x128xbf16>
    %c0_2 = arith.constant 0 : index
    %c0_3 = arith.constant 0 : index
    %5 = vector.load %arg3[%c0_2, %c0_3] : memref<128x128xbf16, #tpu.memory_space<vmem>>, vector<128x128xbf16>
    %cst = arith.constant dense<0.000000e+00> : vector<16x128xf32>
    %6 = tpu.matmul %4, %5, %cst {dimension_numbers = #tpu.dot_dimension_numbers<[1], [0], [0], [1], [0, 0, 1, 1], [], []>} : vector<16x128xbf16>, vector<128x128xbf16>, vector<16x128xf32> -> vector<16x128xf32>
    %cst_4 = arith.constant 0.000000e+00 : f32
    %7 = vector.broadcast %cst_4 : f32 to vector<16x128xf32>
    %8 = arith.maximumf %6, %7 : vector<16x128xf32>
    %c0_5 = arith.constant 0 : index
    %c0_6 = arith.constant 0 : index
    %9 = vector.load %arg6[%c0_5, %c0_6] : memref<16x128xf32, #tpu.memory_space<vmem>>, vector<16x128xf32>
    %10 = arith.truncf %8 : vector<16x128xf32> to vector<16x128xbf16>
    %c0_7 = arith.constant 0 : index
    %c0_8 = arith.constant 0 : index
    %11 = vector.load %arg4[%c0_7, %c0_8] : memref<128x128xbf16, #tpu.memory_space<vmem>>, vector<128x128xbf16>
    %cst_9 = arith.constant dense<0.000000e+00> : vector<16x128xf32>
    %12 = tpu.matmul %10, %11, %cst_9 {dimension_numbers = #tpu.dot_dimension_numbers<[1], [0], [0], [1], [0, 0, 1, 1], [], []>} : vector<16x128xbf16>, vector<128x128xbf16>, vector<16x128xf32> -> vector<16x128xf32>
    %13 = arith.addf %9, %12 : vector<16x128xf32>
    %c0_10 = arith.constant 0 : index
    %c0_11 = arith.constant 0 : index
    %14 = vector.load %arg6[%c0_10, %c0_11] : memref<16x128xf32, #tpu.memory_space<vmem>>, vector<16x128xf32>
    tpu.vector_store %arg6[%c0_10, %c0_11], %13 {strides = array<i32>} : memref<16x128xf32, #tpu.memory_space<vmem>>, vector<16x128xf32>,
    %c0_i32_12 = arith.constant 0 : i32
    %15 = arith.cmpi eq, %arg1, %c0_i32_12 : i32
    %16 = arith.extui %15 : i1 to i32
    %c0_i32_13 = arith.constant 0 : i32
    %17 = arith.cmpi ne, %16, %c0_i32_13 : i32
    scf.if %17 {
      %c0_14 = arith.constant 0 : index
      %c0_15 = arith.constant 0 : index
      %18 = vector.load %arg2[%c0_14, %c0_15] : memref<16x128xf32, #tpu.memory_space<vmem>>, vector<16x128xf32>
      %c0_16 = arith.constant 0 : index
      %c0_17 = arith.constant 0 : index
      %19 = vector.load %arg6[%c0_16, %c0_17] : memref<16x128xf32, #tpu.memory_space<vmem>>, vector<16x128xf32>
      %20 = arith.addf %18, %19 : vector<16x128xf32>
      %c0_18 = arith.constant 0 : index
      %c0_19 = arith.constant 0 : index
      %21 = vector.load %arg5[%c0_18, %c0_19] : memref<16x128xf32, #tpu.memory_space<vmem>>, vector<16x128xf32>
      tpu.vector_store %arg5[%c0_18, %c0_19], %20 {strides = array<i32>} : memref<16x128xf32, #tpu.memory_space<vmem>>, vector<16x128xf32>,
    } else {
    }
    return
  }
  func.func @transform_0(%arg0: i32, %arg1: i32) -> (i32, i32) {
    %c0_i32 = arith.constant 0 : i32
    %c0_i32_0 = arith.constant 0 : i32
    return %arg0, %c0_i32 : i32, i32
  }
  func.func @transform_1(%arg0: i32, %arg1: i32) -> (i32, i32) {
    %c0_i32 = arith.constant 0 : i32
    %c0_i32_0 = arith.constant 0 : i32
    return %c0_i32, %arg1 : i32, i32
  }
  func.func @transform_2(%arg0: i32, %arg1: i32) -> (i32, i32) {
    %c0_i32 = arith.constant 0 : i32
    %c0_i32_0 = arith.constant 0 : i32
    return %arg1, %c0_i32 : i32, i32
  }
  func.func @transform_3(%arg0: i32, %arg1: i32) -> (i32, i32) {
    %c0_i32 = arith.constant 0 : i32
    %c0_i32_0 = arith.constant 0 : i32
    return %arg0, %c0_i32 : i32, i32
  }
}

</mosaic_0001>

<llo_original>
// kernel: qblock_ffn.1
$region0: #{qblock_ffn.1}
  #allocation0 [shape = 'u32[]', space=smem, size = 0x4, offset = 0x4, fixed_abs, tag = 'smem constant byte address 0x4 - core index']
  #allocation1 [shape = 'u32[144,128]{1,0:T(1,128)}', space=vmem, size = 0x12000, scoped, tag = 'internal scratch']
  #allocation2 [shape = 'f32[16,128]{1,0:T(8,128)}', space=vmem, size = 0x2000, scoped, tag = 'scratch operand']
  %s0 = inlined_call_operand.vmem [shape: f32[16,128], index: 0, kind: input, shape index: {}]
  %s1 = inlined_call_operand.vmem [shape: bf16[128,128], index: 1, kind: input, shape index: {}]
  %s2 = inlined_call_operand.vmem [shape: bf16[128,128], index: 2, kind: input, shape index: {}]
  %s3 = inlined_call_operand.vmem [shape: f32[16,128], index: 3, kind: output, shape index: {}]
  %s4 = sld [smem:[#allocation0]]
  $region30: #{qblock_ffn.1} parent=0
    _
  %s6 = ssub.s32 1, %s4
  %s7 = scalar_select 0, %s6, %s4
  // Predicated region
  $region2: #{qblock_ffn.1} parent=0 // pred_check
    _
  $region3: #{qblock_ffn.1} parent=0 // pred_check_branch
    %9 = sbr.rel (0) target = $region5
  $region4: #{qblock_ffn.1} parent=0 // pred_region
    _
  $region5: #{qblock_ffn.1} parent=0 // pred_fallthru
    _
  // Predicated region
  $region6: #{qblock_ffn.1} parent=0 // pred_check
    _
  $region7: #{qblock_ffn.1} parent=0 // pred_check_branch
    %11 = sbr.rel (0) target = $region9
  $region8: #{qblock_ffn.1} parent=0 // pred_region
    _
  $region9: #{qblock_ffn.1} parent=0 // pred_fallthru
    _
  // Predicated region
  $region10: #{qblock_ffn.1} parent=0 // pred_check
    _
  $region11: #{qblock_ffn.1} parent=0 // pred_check_branch
    %13 = sbr.rel (0) target = $region13
  $region12: #{qblock_ffn.1} parent=0 // pred_region
    _
  $region13: #{qblock_ffn.1} parent=0 // pred_fallthru
    _
  %p15 = scmp.eq.s32.totalorder 0, 0
  // Predicated region
  $region14: #{qblock_ffn.1} parent=0 // pred_check
    %p16 = pneg %p15
  $region15: #{qblock_ffn.1} parent=0 // pred_check_branch
    %18 = sbr.rel (%p16) target = $region17
  $region16: #{qblock_ffn.1} parent=0 // pred_region
    %19 = vst [vmem:[#allocation2] sm:$0xff] 0.0
    %20 = vst [vmem:[#allocation2 + $0x8] sm:$0xff] 0.0
  $region17: #{qblock_ffn.1} parent=0 // pred_fallthru
    _
  %v21 = vld [vmem:[%s0] sm:$0xff]
  %v22 = vld [vmem:[%s0 + $0x8] sm:$0xff]
  %v23 = vpack.c.bf16 %v22, %v21
  %v24 = vld [vmem:[%s1] sm:$0xf]
  %v25 = vld [vmem:[%s1 + $0x4] sm:$0xf]
  %v26 = vld [vmem:[%s1 + $0x8] sm:$0xf]
  %v27 = vld [vmem:[%s1 + $0xc] sm:$0xf]
  %v28 = vld [vmem:[%s1 + $0x10] sm:$0xf]
  %v29 = vld [vmem:[%s1 + $0x14] sm:$0xf]
  %v30 = vld [vmem:[%s1 + $0x18] sm:$0xf]
  %v31 = vld [vmem:[%s1 + $0x1c] sm:$0xf]
  %v32 = vld [vmem:[%s1 + $0x20] sm:$0xf]
  %v33 = vld [vmem:[%s1 + $0x24] sm:$0xf]
  %v34 = vld [vmem:[%s1 + $0x28] sm:$0xf]
  %v35 = vld [vmem:[%s1 + $0x2c] sm:$0xf]
  %v36 = vld [vmem:[%s1 + $0x30] sm:$0xf]
  %v37 = vld [vmem:[%s1 + $0x34] sm:$0xf]
  %v38 = vld [vmem:[%s1 + $0x38] sm:$0xf]
  %v39 = vld [vmem:[%s1 + $0x3c] sm:$0xf]
  %v56 = vunpack.c.l.b16 %v24
  %v57 = vunpack.c.l.b16 %v25
  %v58 = vunpack.c.l.b16 %v26
  %v59 = vunpack.c.l.b16 %v27
  %v60 = vunpack.c.l.b16 %v28
  %v61 = vunpack.c.l.b16 %v29
  %v62 = vunpack.c.l.b16 %v30
  %v63 = vunpack.c.l.b16 %v31
  %v64 = vunpack.c.l.b16 %v32
  %v65 = vunpack.c.l.b16 %v33
  %v66 = vunpack.c.l.b16 %v34
  %v67 = vunpack.c.l.b16 %v35
  %v68 = vunpack.c.l.b16 %v36
  %v69 = vunpack.c.l.b16 %v37
  %v70 = vunpack.c.l.b16 %v38
  %v71 = vunpack.c.l.b16 %v39
  %v72 = vpack.c.b16 %v57, %v56
  %v73 = vpack.c.b16 %v59, %v58
  %v74 = vpack.c.b16 %v61, %v60
  %v75 = vpack.c.b16 %v63, %v62
  %v76 = vpack.c.b16 %v65, %v64
  %v77 = vpack.c.b16 %v67, %v66
  %v78 = vpack.c.b16 %v69, %v68
  %v79 = vpack.c.b16 %v71, %v70
  %88 = vmatprep.subr.bf16.mxu0 0
  %89 = vmatpush1.bf16.msra.mxu0 %v79
  %90 = vmatprep.subr.bf16.mxu0 0
  %91 = vmatpush1.bf16.msra.mxu0 %v78
  %92 = vmatprep.subr.bf16.mxu0 0
  %93 = vmatpush1.bf16.msra.mxu0 %v77
  %94 = vmatprep.subr.bf16.mxu0 0
  %95 = vmatpush1.bf16.msra.mxu0 %v76
  %96 = vmatprep.subr.bf16.mxu0 0
  %97 = vmatpush1.bf16.msra.mxu0 %v75
  %98 = vmatprep.subr.bf16.mxu0 0
  %99 = vmatpush1.bf16.msra.mxu0 %v74
  %100 = vmatprep.subr.bf16.mxu0 0
  %101 = vmatpush1.bf16.msra.mxu0 %v73
  %102 = vmatprep.subr.bf16.mxu0 0
  %103 = vmatpush1.bf16.msra.mxu0 %v72
  %104 = vmatprep.subr.bf16.mxu0 0
  %105 = vmatpush2.bf16.msra.mxu0 0
  %106 = vmatprep.subr.bf16.mxu0 0
  %107 = vmatpush2.bf16.msra.mxu0 0
  %108 = vmatprep.subr.bf16.mxu0 0
  %109 = vmatpush2.bf16.msra.mxu0 0
  %110 = vmatprep.subr.bf16.mxu0 0
  %111 = vmatpush2.bf16.msra.mxu0 0
  %112 = vmatprep.subr.bf16.mxu0 0
  %113 = vmatpush2.bf16.msra.mxu0 0
  %114 = vmatprep.subr.bf16.mxu0 0
  %115 = vmatpush2.bf16.msra.mxu0 0
  %116 = vmatprep.subr.bf16.mxu0 0
  %117 = vmatpush2.bf16.msra.mxu0 0
  %118 = vmatprep.subr.bf16.mxu0 0
  %119 = vmatpush2.bf16.msra.mxu0 0
  %120 = vmatprep.mubr.bf16.mxu0 0
  %121 = vmatmul.mubr.bf16.gmra.mxu0 %v23
  %v122 = vpop.f32.mrf.mxu0
  %v123 = vadd.f32 0.0, %v122
  %v124 = vpop.f32.mrf.mxu0
  %v125 = vpop.f32.mrf.mxu0
  %v126 = vadd.f32 0.0, %v125
  %v127 = vpop.f32.mrf.mxu0
  %128 = vdwg.mxu0
  %v129 = vmax.f32 %v123, 0.0
  %v130 = vmax.f32 %v126, 0.0
  %v131 = vld [vmem:[#allocation2] sm:$0xff]
  %v132 = vld [vmem:[#allocation2 + $0x8] sm:$0xff]
  %v133 = vpack.c.bf16 %v130, %v129
  %v134 = vld [vmem:[%s2] sm:$0xf]
  %v135 = vld [vmem:[%s2 + $0x4] sm:$0xf]
  %v136 = vld [vmem:[%s2 + $0x8] sm:$0xf]
  %v137 = vld [vmem:[%s2 + $0xc] sm:$0xf]
  %v138 = vld [vmem:[%s2 + $0x10] sm:$0xf]
  %v139 = vld [vmem:[%s2 + $0x14] sm:$0xf]
  %v140 = vld [vmem:[%s2 + $0x18] sm:$0xf]
  %v141 = vld [vmem:[%s2 + $0x1c] sm:$0xf]
  %v142 = vld [vmem:[%s2 + $0x20] sm:$0xf]
  %v143 = vld [vmem:[%s2 + $0x24] sm:$0xf]
  %v144 = vld [vmem:[%s2 + $0x28] sm:$0xf]
  %v145 = vld [vmem:[%s2 + $0x2c] sm:$0xf]
  %v146 = vld [vmem:[%s2 + $0x30] sm:$0xf]
  %v147 = vld [vmem:[%s2 + $0x34] sm:$0xf]
  %v148 = vld [vmem:[%s2 + $0x38] sm:$0xf]
  %v149 = vld [vmem:[%s2 + $0x3c] sm:$0xf]
  %v166 = vunpack.c.l.b16 %v134
  %v167 = vunpack.c.l.b16 %v135
  %v168 = vunpack.c.l.b16 %v136
  %v169 = vunpack.c.l.b16 %v137
  %v170 = vunpack.c.l.b16 %v138
  %v171 = vunpack.c.l.b16 %v139
  %v172 = vunpack.c.l.b16 %v140
  %v173 = vunpack.c.l.b16 %v141
  %v174 = vunpack.c.l.b16 %v142
  %v175 = vunpack.c.l.b16 %v143
  %v176 = vunpack.c.l.b16 %v144
  %v177 = vunpack.c.l.b16 %v145
  %v178 = vunpack.c.l.b16 %v146
  %v179 = vunpack.c.l.b16 %v147
  %v180 = vunpack.c.l.b16 %v148
  %v181 = vunpack.c.l.b16 %v149
  %v182 = vpack.c.b16 %v167, %v166
  %v183 = vpack.c.b16 %v169, %v168
  %v184 = vpack.c.b16 %v171, %v170
  %v185 = vpack.c.b16 %v173, %v172
  %v186 = vpack.c.b16 %v175, %v174
  %v187 = vpack.c.b16 %v177, %v176
  %v188 = vpack.c.b16 %v179, %v178
  %v189 = vpack.c.b16 %v181, %v180
  %198 = vmatprep.subr.bf16.mxu0 0
  %199 = vmatpush1.bf16.msra.mxu0 %v189
  %200 = vmatprep.subr.bf16.mxu0 0
  %201 = vmatpush1.bf16.msra.mxu0 %v188
  %202 = vmatprep.subr.bf16.mxu0 0
  %203 = vmatpush1.bf16.msra.mxu0 %v187
  %204 = vmatprep.subr.bf16.mxu0 0
  %205 = vmatpush1.bf16.msra.mxu0 %v186
  %206 = vmatprep.subr.bf16.mxu0 0
  %207 = vmatpush1.bf16.msra.mxu0 %v185
  %208 = vmatprep.subr.bf16.mxu0 0
  %209 = vmatpush1.bf16.msra.mxu0 %v184
  %210 = vmatprep.subr.bf16.mxu0 0
  %211 = vmatpush1.bf16.msra.mxu0 %v183
  %212 = vmatprep.subr.bf16.mxu0 0
  %213 = vmatpush1.bf16.msra.mxu0 %v182
  %214 = vmatprep.subr.bf16.mxu0 0
  %215 = vmatpush2.bf16.msra.mxu0 0
  %216 = vmatprep.subr.bf16.mxu0 0
  %217 = vmatpush2.bf16.msra.mxu0 0
  %218 = vmatprep.subr.bf16.mxu0 0
  %219 = vmatpush2.bf16.msra.mxu0 0
  %220 = vmatprep.subr.bf16.mxu0 0
  %221 = vmatpush2.bf16.msra.mxu0 0
  %222 = vmatprep.subr.bf16.mxu0 0
  %223 = vmatpush2.bf16.msra.mxu0 0
  %224 = vmatprep.subr.bf16.mxu0 0
  %225 = vmatpush2.bf16.msra.mxu0 0
  %226 = vmatprep.subr.bf16.mxu0 0
  %227 = vmatpush2.bf16.msra.mxu0 0
  %228 = vmatprep.subr.bf16.mxu0 0
  %229 = vmatpush2.bf16.msra.mxu0 0
  %230 = vmatprep.mubr.bf16.mxu0 0
  %231 = vmatmul.mubr.bf16.gmra.mxu0 %v133
  %v232 = vpop.f32.mrf.mxu0
  %v233 = vadd.f32 0.0, %v232
  %v234 = vpop.f32.mrf.mxu0
  %v235 = vpop.f32.mrf.mxu0
  %v236 = vadd.f32 0.0, %v235
  %v237 = vpop.f32.mrf.mxu0
  %238 = vdwg.mxu0
  %v239 = vadd.f32 %v131, %v233
  %v240 = vadd.f32 %v132, %v236
  %241 = vst [vmem:[#allocation2] sm:$0xff] %v239
  %242 = vst [vmem:[#allocation2 + $0x8] sm:$0xff] %v240
  // Predicated region
  $region18: #{qblock_ffn.1} parent=0 // pred_check
    %p243 = pneg %p15
  $region19: #{qblock_ffn.1} parent=0 // pred_check_branch
    %245 = sbr.rel (%p243) target = $region21
  $region20: #{qblock_ffn.1} parent=0 // pred_region
    %v246 = vld [vmem:[%s0] sm:$0xff]
    %v247 = vld [vmem:[%s0 + $0x8] sm:$0xff]
    %v248 = vld [vmem:[#allocation2] sm:$0xff]
    %v249 = vld [vmem:[#allocation2 + $0x8] sm:$0xff]
    %v250 = vadd.f32 %v246, %v248
    %v251 = vadd.f32 %v247, %v249
    %252 = vst [vmem:[%s3] sm:$0xff] %v250
    %253 = vst [vmem:[%s3 + $0x8] sm:$0xff] %v251
  $region21: #{qblock_ffn.1} parent=0 // pred_fallthru
    _
  // Predicated region
  $region22: #{qblock_ffn.1} parent=0 // pred_check
    _
  $region23: #{qblock_ffn.1} parent=0 // pred_check_branch
    %255 = sbr.rel (0) target = $region25
  $region24: #{qblock_ffn.1} parent=0 // pred_region
    _
  $region25: #{qblock_ffn.1} parent=0 // pred_fallthru
    _
  // Predicated region
  $region26: #{qblock_ffn.1} parent=0 // pred_check
    _
  $region27: #{qblock_ffn.1} parent=0 // pred_check_branch
    %257 = sbr.rel (0) target = $region29
  $region28: #{qblock_ffn.1} parent=0 // pred_region
    _
  $region29: #{qblock_ffn.1} parent=0 // pred_fallthru
    _

</llo_original>
